<compile_context>
chip_gen: v5e
topology: v5e:2x2
jax: 0.10.0
libtpu: 0.0.40
codegen_flags: <defaults>
</compile_context>

<pallas_src>
import functools

import jax
import jax.numpy as jnp
from jax.experimental import pallas as pl
from jax.experimental.pallas import tpu as pltpu

GAMMA = 2  # self.gamma (integer -> explicit square, no pow)


def _focal_loss_kernel(x_ref, t_ref, o_ref, *, n_total, tile_n):
    # x_ref: (tile_n, C) logits in native dtype (VMEM)
    # t_ref: (tile_n, 1) int32 targets (VMEM)
    # o_ref: (1, 1) float32 resident accumulator / final loss
    i = pl.program_id(0)

    @pl.when(i == 0)
    def _init():
        o_ref[...] = jnp.zeros_like(o_ref)

    x = x_ref[...].astype(jnp.float32)          # upcast in-kernel (bf16 -> f32)
    tn, c = x.shape
    t = t_ref[...]                              # (tn, 1) int32

    # numerically stable log-sum-exp over classes
    # (the only O(N*C) transcendental left is this exp)
    m = jnp.max(x, axis=1, keepdims=True)                              # (tn, 1)
    lse = jnp.log(jnp.sum(jnp.exp(x - m), axis=1, keepdims=True))      # (tn, 1)

    # gather the target logit via fused compare+select (single VPU pass)
    cols = jax.lax.broadcasted_iota(jnp.int32, (tn, c), 1)
    x_t = jnp.sum(jnp.where(cols == t, x, 0.0), axis=1, keepdims=True)  # (tn, 1)

    # focal term only on the gathered column -> everything below is O(tile_n)
    logpt_t = x_t - m - lse                     # log_softmax(x)[n, t[n]]
    pt_t = jnp.exp(logpt_t)
    one_m = 1.0 - pt_t
    focal_t = one_m * one_m * logpt_t           # gamma == 2: explicit square

    # mask rows past the true batch size (ragged last tile reads garbage)
    rows = i * tile_n + jax.lax.broadcasted_iota(jnp.int32, (tn, 1), 0)
    focal_t = jnp.where(rows < n_total, focal_t, 0.0)

    # nll_loss(weight=None): accumulate raw -sum; global 1/N applied once below
    o_ref[...] += -jnp.sum(focal_t)

    @pl.when(i == pl.num_programs(0) - 1)
    def _finalize():
        o_ref[...] = o_ref[...] * jnp.float32(1.0 / n_total)


def _pick_tile_n(n, c, itemsize):
    """Sublane-aligned batch tile; ~2 MiB per in-flight logits buffer so a
    double-buffered pipeline fits v5e's 16 MiB scoped-VMEM default."""
    per_buffer_budget = 2 * 1024 * 1024
    t = per_buffer_budget // max(1, c * itemsize)
    t = max(8, min(t, 2048, n))
    if t >= n:
        return n                      # single tile: block equals full dim
    return max(8, (t // 8) * 8)       # multiple of 8; ragged tail is masked


def focal_loss(logits: jax.Array, target: jax.Array, *, tile_n=None) -> jax.Array:
    """logits: [N, C] (any float dtype), target: [N] int -> scalar f32 loss."""
    n, c = logits.shape
    itemsize = jnp.dtype(logits.dtype).itemsize
    if tile_n is None:
        tile_n = _pick_tile_n(n, c, itemsize)
    num_tiles = pl.cdiv(n, tile_n)
    t2d = target.astype(jnp.int32).reshape(n, 1)

    kernel = functools.partial(_focal_loss_kernel, n_total=n, tile_n=tile_n)

    out = pl.pallas_call(
        kernel,
        out_shape=jax.ShapeDtypeStruct((1, 1), jnp.float32),
        grid=(num_tiles,),
        in_specs=[
            pl.BlockSpec((tile_n, c), lambda i: (i, 0)),
            pl.BlockSpec((tile_n, 1), lambda i: (i, 0)),
        ],
        # output block index is constant -> resident accumulator across grid
        out_specs=pl.BlockSpec((1, 1), lambda i: (0, 0)),
        compiler_params=pltpu.CompilerParams(
            dimension_semantics=("arbitrary",),
        ),
        cost_estimate=pl.CostEstimate(
            flops=7 * n * c,
            transcendentals=n * c + 2 * n,
            bytes_accessed=n * c * itemsize + n * 4 + 4,
        ),
    )(logits, t2d)
    return out[0, 0]


def _focal_loss_ref(logits, target):
    logpt = jax.nn.log_softmax(logits.astype(jnp.float32), axis=1)
    pt = jnp.exp(logpt)
    focal = (1.0 - pt) ** GAMMA * logpt
    picked = jnp.take_along_axis(
        focal, target[:, None].astype(jnp.int32), axis=1)[:, 0]
    return -jnp.mean(picked)


if __name__ == "__main__":
    N, C = 8, 32
    key = jax.random.PRNGKey(0)
    kx, kt = jax.random.split(key)
    logits_f32 = jax.random.normal(kx, (N, C), dtype=jnp.float32)
    target = jax.random.randint(kt, (N,), 0, C, dtype=jnp.int32)

    # float32 path
    loss = focal_loss(logits_f32, target)
    jax.block_until_ready(loss)
    ref = _focal_loss_ref(logits_f32, target)
    assert jnp.allclose(loss, ref, rtol=1e-5, atol=1e-5), (loss, ref)

    # native bf16 path (no wrapper upcast; kernel upcasts in VMEM)
    logits_bf16 = logits_f32.astype(jnp.bfloat16)
    loss_bf = focal_loss(logits_bf16, target)
    jax.block_until_ready(loss_bf)
    ref_bf = _focal_loss_ref(logits_bf16, target)
    assert jnp.allclose(loss_bf, ref_bf, rtol=1e-3, atol=1e-3), (loss_bf, ref_bf)

    print("KERNEL_OK")
</pallas_src>

<mosaic_0001>
module attributes {stable_mosaic.version = 11 : i64} {
  func.func @_focal_loss_kernel(%arg0: i32, %arg1: memref<8x32xf32, #tpu.memory_space<vmem>>, %arg2: memref<8x1xi32, #tpu.memory_space<vmem>>, %arg3: memref<1x1xf32, #tpu.memory_space<vmem>>) attributes {dimension_semantics = [#tpu.dimension_semantics<arbitrary>], iteration_bounds = array<i64: 1>, scalar_prefetch = 0 : i64, scratch_operands = 0 : i64, tpu.core_type = #tpu.core_type<tc>, window_params = [{transform_indices = @transform_0, window_bounds = array<i64: 8, 32>}, {transform_indices = @transform_1, window_bounds = array<i64: 8, 1>}, {pipeline_mode = #tpu.pipeline_mode<synchronous>, transform_indices = @transform_2, window_bounds = array<i64: 1, 1>}]} {
    %c0_i32 = arith.constant 0 : i32
    %0 = arith.cmpi eq, %arg0, %c0_i32 : i32
    %1 = arith.extui %0 : i1 to i32
    %c0_i32_0 = arith.constant 0 : i32
    %2 = arith.cmpi ne, %1, %c0_i32_0 : i32
    scf.if %2 {
      %cst_18 = arith.constant 0.000000e+00 : f32
      %47 = vector.broadcast %cst_18 : f32 to vector<1x1xf32>
      %c0_19 = arith.constant 0 : index
      %c0_20 = arith.constant 0 : index
      %48 = vector.load %arg3[%c0_19, %c0_20] : memref<1x1xf32, #tpu.memory_space<vmem>>, vector<1x1xf32>
      tpu.vector_store %arg3[%c0_19, %c0_20], %47 {strides = array<i32>} : memref<1x1xf32, #tpu.memory_space<vmem>>, vector<1x1xf32>,
    } else {
    }
    %c0 = arith.constant 0 : index
    %c0_1 = arith.constant 0 : index
    %3 = vector.load %arg1[%c0, %c0_1] : memref<8x32xf32, #tpu.memory_space<vmem>>, vector<8x32xf32>
    %c0_2 = arith.constant 0 : index
    %c0_3 = arith.constant 0 : index
    %4 = vector.load %arg2[%c0_2, %c0_3] : memref<8x1xi32, #tpu.memory_space<vmem>>, vector<8x1xi32>
    %cst = arith.constant dense<0xFF800000> : vector<8xf32>
    %5 = vector.multi_reduction <maximumf>, %3, %cst [1] : vector<8x32xf32> to vector<8xf32>
    %6 = vector.shape_cast %5 : vector<8xf32> to vector<8x1xf32>
    %7 = vector.broadcast %6 : vector<8x1xf32> to vector<8x32xf32>
    %8 = arith.subf %3, %7 : vector<8x32xf32>
    %9 = math.exp %8 : vector<8x32xf32>
    %cst_4 = arith.constant dense<0.000000e+00> : vector<8xf32>
    %10 = vector.multi_reduction <add>, %9, %cst_4 [1] : vector<8x32xf32> to vector<8xf32>
    %11 = vector.shape_cast %10 : vector<8xf32> to vector<8x1xf32>
    %12 = math.log %11 : vector<8x1xf32>
    %13 = tpu.iota {dimensions = array<i32: 1>} : vector<8x32xi32>
    %14 = vector.broadcast %4 : vector<8x1xi32> to vector<8x32xi32>
    %15 = arith.cmpi eq, %13, %14 : vector<8x32xi32>
    %cst_5 = arith.constant 0.000000e+00 : f32
    %16 = vector.broadcast %cst_5 : f32 to vector<8x32xf32>
    %17 = arith.select %15, %3, %16 : vector<8x32xi1>, vector<8x32xf32>
    %cst_6 = arith.constant dense<0.000000e+00> : vector<8xf32>
    %18 = vector.multi_reduction <add>, %17, %cst_6 [1] : vector<8x32xf32> to vector<8xf32>
    %19 = vector.shape_cast %18 : vector<8xf32> to vector<8x1xf32>
    %20 = arith.subf %19, %6 : vector<8x1xf32>
    %21 = arith.subf %20, %12 : vector<8x1xf32>
    %22 = math.exp %21 : vector<8x1xf32>
    %cst_7 = arith.constant 1.000000e+00 : f32
    %23 = vector.broadcast %cst_7 : f32 to vector<8x1xf32>
    %24 = arith.subf %23, %22 : vector<8x1xf32>
    %25 = arith.mulf %24, %24 : vector<8x1xf32>
    %26 = arith.mulf %25, %21 : vector<8x1xf32>
    %c8_i32 = arith.constant 8 : i32
    %27 = arith.muli %arg0, %c8_i32 : i32
    %28 = tpu.iota {dimensions = array<i32: 0>} : vector<8x1xi32>
    %29 = vector.broadcast %27 : i32 to vector<8x1xi32>
    %30 = arith.addi %29, %28 : vector<8x1xi32>
    %c8_i32_8 = arith.constant 8 : i32
    %31 = vector.broadcast %c8_i32_8 : i32 to vector<8x1xi32>
    %32 = arith.cmpi slt, %30, %31 : vector<8x1xi32>
    %cst_9 = arith.constant 0.000000e+00 : f32
    %33 = vector.broadcast %cst_9 : f32 to vector<8x1xf32>
    %34 = arith.select %32, %26, %33 : vector<8x1xi1>, vector<8x1xf32>
    %c0_10 = arith.constant 0 : index
    %c0_11 = arith.constant 0 : index
    %35 = vector.load %arg3[%c0_10, %c0_11] : memref<1x1xf32, #tpu.memory_space<vmem>>, vector<1x1xf32>
    %36 = vector.shape_cast %34 : vector<8x1xf32> to vector<1x8x1xf32>
    %cst_12 = arith.constant dense<0.000000e+00> : vector<1xf32>
    %37 = vector.multi_reduction <add>, %36, %cst_12 [1, 2] : vector<1x8x1xf32> to vector<1xf32>
    %38 = vector.shape_cast %37 : vector<1xf32> to vector<1x1x1xf32>
    %39 = vector.extract %38[0, 0, 0] : f32 from vector<1x1x1xf32>
    %cst_13 = arith.constant 0.000000e+00 : f32
    %40 = arith.subf %cst_13, %39 : f32
    %41 = vector.broadcast %40 : f32 to vector<1x1xf32>
    %42 = arith.addf %35, %41 : vector<1x1xf32>
    %c0_14 = arith.constant 0 : index
    %c0_15 = arith.constant 0 : index
    %43 = vector.load %arg3[%c0_14, %c0_15] : memref<1x1xf32, #tpu.memory_space<vmem>>, vector<1x1xf32>
    tpu.vector_store %arg3[%c0_14, %c0_15], %42 {strides = array<i32>} : memref<1x1xf32, #tpu.memory_space<vmem>>, vector<1x1xf32>,
    %c0_i32_16 = arith.constant 0 : i32
    %44 = arith.cmpi eq, %arg0, %c0_i32_16 : i32
    %45 = arith.extui %44 : i1 to i32
    %c0_i32_17 = arith.constant 0 : i32
    %46 = arith.cmpi ne, %45, %c0_i32_17 : i32
    scf.if %46 {
      %c0_18 = arith.constant 0 : index
      %c0_19 = arith.constant 0 : index
      %47 = vector.load %arg3[%c0_18, %c0_19] : memref<1x1xf32, #tpu.memory_space<vmem>>, vector<1x1xf32>
      %cst_20 = arith.constant 1.250000e-01 : f32
      %48 = vector.broadcast %cst_20 : f32 to vector<1x1xf32>
      %49 = arith.mulf %47, %48 : vector<1x1xf32>
      %c0_21 = arith.constant 0 : index
      %c0_22 = arith.constant 0 : index
      %50 = vector.load %arg3[%c0_21, %c0_22] : memref<1x1xf32, #tpu.memory_space<vmem>>, vector<1x1xf32>
      tpu.vector_store %arg3[%c0_21, %c0_22], %49 {strides = array<i32>} : memref<1x1xf32, #tpu.memory_space<vmem>>, vector<1x1xf32>,
    } else {
    }
    return
  }
  func.func @transform_0(%arg0: i32) -> (i32, i32) {
    %c0_i32 = arith.constant 0 : i32
    %c0_i32_0 = arith.constant 0 : i32
    return %arg0, %c0_i32 : i32, i32
  }
  func.func @transform_1(%arg0: i32) -> (i32, i32) {
    %c0_i32 = arith.constant 0 : i32
    %c0_i32_0 = arith.constant 0 : i32
    return %arg0, %c0_i32 : i32, i32
  }
  func.func @transform_2(%arg0: i32) -> (i32, i32) {
    %c0_i32 = arith.constant 0 : i32
    %c0_i32_0 = arith.constant 0 : i32
    %c0_i32_1 = arith.constant 0 : i32
    return %c0_i32, %c0_i32_0 : i32, i32
  }
}

</mosaic_0001>

<llo_original>
// kernel: tpu_custom_call.1
$region0: #{tpu_custom_call.1}
  #allocation0 [shape = 'u32[]', space=smem, size = 0x4, offset = 0x4, fixed_abs, tag = 'smem constant byte address 0x4 - core index']
  #allocation1 [shape = 'u32[72,128]{1,0:T(1,128)}', space=vmem, size = 0x9000, scoped, tag = 'internal scratch']
  %s0 = inlined_call_operand.vmem [shape: f32[8,32], index: 0, kind: input, shape index: {}]
  %s1 = inlined_call_operand.vmem [shape: s32[8,1], index: 1, kind: input, shape index: {}]
  %s2 = inlined_call_operand.hbm [shape: f32[1,1], index: 2, kind: output, shape index: {}]
  %s3 = sld [smem:[#allocation0]]
  $region26: #{tpu_custom_call.1} parent=0
    _
  %s5 = ssub.s32 1, %s3
  %s6 = scalar_select 0, %s5, %s3
  $region1: #{tpu_custom_call.1} parent=0
    #allocation2 [shape = 'u8[512]{0}', space=vmem, size = 0x400, scoped, tag = 'output window, operand 0, single buffered']
    #allocation3 [shape = 's32[1]{0}', space=sflag, size = 0x4, scoped, tag = 'scoped memory for tpu_custom_call.1']
    %7 = vsyncpa [#allocation3], 0
    // Predicated region
    $region2: #{tpu_custom_call.1} parent=1 // pred_check
      _
    $region3: #{tpu_custom_call.1} parent=1 // pred_check_branch
      %9 = sbr.rel (0) target = $region5
    $region4: #{tpu_custom_call.1} parent=1 // pred_region
      _
    $region5: #{tpu_custom_call.1} parent=1 // pred_fallthru
      _
    // Predicated region
    $region6: #{tpu_custom_call.1} parent=1 // pred_check
      _
    $region7: #{tpu_custom_call.1} parent=1 // pred_check_branch
      %11 = sbr.rel (0) target = $region9
    $region8: #{tpu_custom_call.1} parent=1 // pred_region
      _
    $region9: #{tpu_custom_call.1} parent=1 // pred_fallthru
      _
    %p12 = scmp.eq.s32.totalorder 0, 0
    // Predicated region
    $region10: #{tpu_custom_call.1} parent=1 // pred_check
      %p13 = pneg %p12
    $region11: #{tpu_custom_call.1} parent=1 // pred_check_branch
      %15 = sbr.rel (%p13) target = $region13
    $region12: #{tpu_custom_call.1} parent=1 // pred_region
      %vm16 = vcmask 0
      %17 = vst.msk [vmem:[#allocation2] sm:$0x1] %vm16, 0.0
    $region13: #{tpu_custom_call.1} parent=1 // pred_fallthru
      _
    %v18 = vld [vmem:[%s0] sm:$0xff]
    %v19 = vld [vmem:[%s1] sm:$0xff]
    %vm20 = vcmask 261120
    %v21 = vsel %vm20, %v18, -inf
    %22 = vmax.xlane.f32.xlu0 %v21
    %v23 = vpop.xlane.xlu0 %22
    %v24 = vsub.f32 %v18, %v23
    %v25 = vmul.f32 %v24, 1.442695
    %v26 = vpow.pop %v25
    %v27 = vsel %vm20, %v26, 0.0
    %28 = vadd.xlane.f32.xlu0 %v27
    %v29 = vpop.xlane.xlu0 %28
    %v30 = vlog2.pop %v29
    %v31 = vmul.f32 %v30, 0.6931472
    %v32 = vlaneseq
    %v33 = vand.u32 %v32, 127
    %34 = vset.pattern.permute.xlu0 0
    %35 = vperm.xlu0 %34, %v19
    %v36 = vpop.permute.xlu0 %35
    %vm37 = vcmp.eq.s32.totalorder %v33, %v36
    %v38 = vsel %vm37, %v18, 0.0
    %v39 = vsel %vm20, %v38, 0.0
    %40 = vadd.xlane.f32.xlu0 %v39
    %v41 = vpop.xlane.xlu0 %40
    %v42 = vsub.f32 %v41, %v23
    %v43 = vsub.f32 %v42, %v31
    %v44 = vmul.f32 %v43, 1.442695
    %v45 = vpow.pop %v44
    %v46 = vsub.f32 1.0, %v45
    %v47 = vmul.f32 %v46, %v46
    %v48 = vmul.f32 %v47, %v43
    %s49 = smul.u32 0, 8
    %v50 = vlaneseq
    %v51 = vshrl.u32 %v50, 7
    %v52 = vstv %s49
    %v53 = vadd.s32 %v52, %v51
    %vm54 = vcmp.lt.s32.totalorder %v53, 8
    %v55 = vsel %vm54, %v48, 0.0
    %v56 = vld [vmem:[#allocation2] sm:$0x1]
    %vm57 = vcmask 7168
    %v58 = vsel %vm57, %v55, 0.0
    %59 = vadd.xlane.f32.xlu0 %v58
    %v60 = vpop.xlane.xlu0 %59
    %v61 = vrot.slane %v60, 4
    %v62 = vadd.f32 %v60, %v61
    %v63 = vrot.slane %v62, 2
    %v64 = vadd.f32 %v62, %v63
    %v65 = vrot.slane %v64, 1
    %v66 = vadd.f32 %v64, %v65
    %s67 = vtos %v66
    %s68 = ssub.f32 0.0, %s67
    %v69 = vstv %s68
    %v70 = vadd.f32 %v56, %v69
    %vm71 = vcmask 0
    %72 = vst.msk [vmem:[#allocation2] sm:$0x1] %vm71, %v70
    // Predicated region
    $region14: #{tpu_custom_call.1} parent=1 // pred_check
      %p73 = pneg %p12
    $region15: #{tpu_custom_call.1} parent=1 // pred_check_branch
      %75 = sbr.rel (%p73) target = $region17
    $region16: #{tpu_custom_call.1} parent=1 // pred_region
      %v76 = vld [vmem:[#allocation2] sm:$0x1]
      %v77 = vmul.f32 %v76, 0.125
      %78 = vst.msk [vmem:[#allocation2] sm:$0x1] %vm71, %v77
    $region17: #{tpu_custom_call.1} parent=1 // pred_fallthru
      _
    // Predicated region
    $region18: #{tpu_custom_call.1} parent=1 // pred_check
      _
    $region19: #{tpu_custom_call.1} parent=1 // pred_check_branch
      %80 = sbr.rel (0) target = $region21
    $region20: #{tpu_custom_call.1} parent=1 // pred_region
      %82 = vsyncadd [#allocation3], 0
      %s84 = sshll.u32 [#allocation2], 4
      %s85 = int_to_ptr.vmem [resolvable:$true] %s84
      %s86 = sshll.u32 %s2, 4
      %s87 = int_to_ptr.hbm [resolvable:$true] %s86
      %89 = dma.vmem_to_hbm [thread:$0]  %s85, 16, %s87, [#allocation3]
    $region21: #{tpu_custom_call.1} parent=1 // pred_fallthru
      _
    // Predicated region
    $region22: #{tpu_custom_call.1} parent=1 // pred_check
      _
    $region23: #{tpu_custom_call.1} parent=1 // pred_check_branch
      %91 = sbr.rel (0) target = $region25
    $region24: #{tpu_custom_call.1} parent=1 // pred_region
      %93 = dma.done [#allocation3], 16
    $region25: #{tpu_custom_call.1} parent=1 // pred_fallthru
      _
    %94 = vsyncpa [#allocation3], 1

</llo_original>
